<compile_context>
chip_gen: v7x
topology: tpu7x:2x2x1
jax: 0.10.0
libtpu: 0.0.40
codegen_flags: <defaults>
</compile_context>

<pallas_src>
import functools

import jax
import jax.numpy as jnp
from jax.experimental import pallas as pl
from jax.experimental.pallas import tpu as pltpu

_K_TEMPS = 5  # conservative count of live full-tile f32 temporaries


def _kldiv_kernel(logits_ref, targets_ref, out_ref,
                  m_q, s_q, m_p, s_p, num_acc, *, inv_T, N):
    i = pl.program_id(0)          # row-block index ("parallel")
    k = pl.program_id(1)          # class-chunk index ("arbitrary" reduction)
    nk = pl.num_programs(1)
    tm = logits_ref.shape[0]      # rows in this block (static)

    @pl.when(k == 0)
    def _():
        m_q[...] = jnp.full_like(m_q, -jnp.inf)
        m_p[...] = jnp.full_like(m_p, -jnp.inf)
        s_q[...] = jnp.zeros_like(s_q)
        s_p[...] = jnp.zeros_like(s_p)
        num_acc[...] = jnp.zeros_like(num_acc)

    lz = logits_ref[...].astype(jnp.float32) * inv_T
    tz = targets_ref[...].astype(jnp.float32) * inv_T

    # --- q (logits) side: online log-sum-exp (no shifted copy materialized) ---
    m_q_old = m_q[...]
    m_q_new = jnp.maximum(m_q_old, jnp.max(lz, axis=1, keepdims=True))
    m_q_safe = jnp.where(m_q_new == -jnp.inf, 0.0, m_q_new)
    a_q = jnp.where(m_q_old == -jnp.inf, 0.0, jnp.exp(m_q_old - m_q_new))
    s_q[...] = a_q * s_q[...] + jnp.sum(jnp.exp(lz - m_q_safe),
                                        axis=1, keepdims=True)
    m_q[...] = m_q_new

    # --- p (targets) side: online softmax pieces + numerator sum_c ez*(tz-lz) ---
    m_p_old = m_p[...]
    m_p_new = jnp.maximum(m_p_old, jnp.max(tz, axis=1, keepdims=True))
    m_p_safe = jnp.where(m_p_new == -jnp.inf, 0.0, m_p_new)
    a_p = jnp.where(m_p_old == -jnp.inf, 0.0, jnp.exp(m_p_old - m_p_new))
    ez = jnp.exp(tz - m_p_safe)
    s_p[...] = a_p * s_p[...] + jnp.sum(ez, axis=1, keepdims=True)
    # xlogy-style guard: -inf-masked target classes give ez == 0 exactly and
    # (tz - lz) == -inf; PyTorch's kl_div treats 0*log0 as 0.
    contrib = jnp.where(ez > 0.0, ez * (tz - lz), 0.0)
    num_acc[...] = a_p * num_acc[...] + jnp.sum(contrib, axis=1, keepdims=True)
    m_p[...] = m_p_new

    @pl.when(k == nk - 1)
    def _():
        row_kl = (num_acc[...] * pl.reciprocal(s_p[...], approx=False)
                  + (m_q[...] - m_p[...])
                  + jnp.log(s_q[...]) - jnp.log(s_p[...]))           # (tm, 1)
        # mask rows past N (partial last row block reads unspecified pad rows)
        row_ids = i * tm + jax.lax.broadcasted_iota(jnp.int32, row_kl.shape, 0)
        row_kl = jnp.where(row_ids < N, row_kl, 0.0)
        # Lane/sublane-dense store of the per-block partial; wrapper reads [0,0].
        out_ref[...] = jnp.full((1, 8, 128), jnp.sum(row_kl), dtype=jnp.float32)


def _pick_blocks(N, C, itemsize, block_rows=None, col_block=None,
                 max_rows=1024, max_cols=4096):
    """Chip-aware (tm, tc) selection budgeting inputs *and* f32 temporaries."""
    try:
        vmem_cap = int(pltpu.get_tpu_info().vmem_capacity_bytes)
    except Exception:
        vmem_cap = 128 << 20
    # Total working-set budget: ~60% of physical VMEM, capped at 48 MiB
    # (-> ~38 MiB on v7x's 64 MiB, 48 MiB on v5e/v6e's 128 MiB).
    budget = min(int(vmem_cap * 0.6), 48 << 20)

    # Class-axis chunk: largest multiple of 128 that divides C, <= max_cols.
    # (Only exact divisors -> no partially-OOB class blocks to worry about.)
    if col_block is not None:
        tc = col_block
    elif C <= max_cols or C % 128 != 0:
        tc = C
    else:
        tc = 128
        d = 128
        while d <= max_cols:
            if C % d == 0:
                tc = d
            d += 128

    if block_rows is not None:
        tm = block_rows
    else:
        # 2 inputs x 2 pipeline buffers + ~K_TEMPS live f32 full-tile temps.
        per_row = tc * (2 * 2 * itemsize + _K_TEMPS * 4)
        tm = max(budget // per_row, 16)
        tm = min(tm, max_rows)
        # Keep >= 2 row blocks when the batch is big enough so the 'parallel'
        # axis can shard across both TensorCores on v7x (harmless on 1-TC chips).
        if N >= 32:
            tm = min(tm, -(-N // 2))
        if tm >= N:
            tm = N                      # full-extent row block (layout-legal)
        else:
            tm = max((tm // 16) * 16, 16)  # sublane-friendly for f32 and bf16
    return tm, tc, vmem_cap


def kldiv_pallas(logits, targets, T=1.0, reduction='batchmean',
                 block_rows=None, col_block=None):
    """Pallas KD KL divergence.  Prefer bf16 logits/targets to halve HBM traffic."""
    assert reduction == 'batchmean', "only 'batchmean' is implemented"
    assert logits.shape == targets.shape and logits.ndim == 2
    N, C = logits.shape
    itemsize = max(jnp.dtype(logits.dtype).itemsize,
                   jnp.dtype(targets.dtype).itemsize)
    tm, tc, vmem_cap = _pick_blocks(N, C, itemsize,
                                    block_rows=block_rows, col_block=col_block)
    assert tc == C or (C % tc == 0 and tc % 128 == 0), (tc, C)

    num_row_blocks = pl.cdiv(N, tm)
    num_col_blocks = pl.cdiv(C, tc)

    kernel = functools.partial(_kldiv_kernel, inv_T=1.0 / float(T), N=N)

    # VMEM working set: 2 inputs x 2 pipeline buffers + f32 temps + scratch.
    work_bytes = (2 * 2 * tm * tc * itemsize
                  + _K_TEMPS * tm * tc * 4
                  + 5 * tm * 128 * 4)
    vmem_limit = int(max(work_bytes + (8 << 20), 32 << 20))
    vmem_limit = int(min(vmem_limit, vmem_cap - (8 << 20)))

    partials = pl.pallas_call(
        kernel,
        out_shape=jax.ShapeDtypeStruct((num_row_blocks, 8, 128), jnp.float32),
        grid_spec=pltpu.PrefetchScalarGridSpec(
            num_scalar_prefetch=0,
            grid=(num_row_blocks, num_col_blocks),
            in_specs=[
                pl.BlockSpec((tm, tc), lambda i, k: (i, k)),
                pl.BlockSpec((tm, tc), lambda i, k: (i, k)),
            ],
            out_specs=pl.BlockSpec((1, 8, 128), lambda i, k: (i, 0, 0)),
            scratch_shapes=[
                pltpu.VMEM((tm, 1), jnp.float32),   # m_q (running max, logits)
                pltpu.VMEM((tm, 1), jnp.float32),   # s_q (running denom, logits)
                pltpu.VMEM((tm, 1), jnp.float32),   # m_p (running max, targets)
                pltpu.VMEM((tm, 1), jnp.float32),   # s_p (running denom, targets)
                pltpu.VMEM((tm, 1), jnp.float32),   # running sum ez*(tz - lz)
            ],
        ),
        compiler_params=pltpu.CompilerParams(
            dimension_semantics=("parallel", "arbitrary"),
            vmem_limit_bytes=vmem_limit,
        ),
    )(logits, targets)

    scale = (float(T) * float(T)) / float(N)
    return jnp.sum(partials[:, 0, 0]) * scale


def _kldiv_ref(logits, targets, T=1.0):
    lq = jax.nn.log_softmax(logits / T, axis=1)
    p = jax.nn.softmax(targets / T, axis=1)
    lp = jax.nn.log_softmax(targets / T, axis=1)
    return jnp.sum(p * (lp - lq)) / logits.shape[0] * (T * T)


if __name__ == "__main__":
    key = jax.random.PRNGKey(0)
    k1, k2, k3, k4, k5, k6 = jax.random.split(key, 6)

    # Test 1: f32, multi-row-block grid with a masked partial last block AND
    # a chunked class axis (2 chunks) to exercise the online-softmax path.
    N, C, T = 20, 256, 4.0
    logits = jax.random.normal(k1, (N, C), dtype=jnp.float32)
    targets = jax.random.normal(k2, (N, C), dtype=jnp.float32)
    out = jax.block_until_ready(
        kldiv_pallas(logits, targets, T=T, block_rows=8, col_block=128))
    ref = _kldiv_ref(logits, targets, T=T)
    assert jnp.allclose(out, ref, rtol=1e-5, atol=1e-5), (out, ref)

    # Test 2: bf16 inputs (half the HBM traffic), auto block sizes, T=2.
    N2, C2, T2 = 24, 128, 2.0
    logits_bf = jax.random.normal(k3, (N2, C2), dtype=jnp.float32).astype(jnp.bfloat16)
    targets_bf = jax.random.normal(k4, (N2, C2), dtype=jnp.float32).astype(jnp.bfloat16)
    out_bf = jax.block_until_ready(kldiv_pallas(logits_bf, targets_bf, T=T2))
    ref_bf = _kldiv_ref(logits_bf.astype(jnp.float32),
                        targets_bf.astype(jnp.float32), T=T2)
    assert jnp.allclose(out_bf, ref_bf, rtol=1e-5, atol=1e-5), (out_bf, ref_bf)

    # Test 3: class count not a multiple of 128 (lane padding in the axis=1
    # reductions of a full-extent block).
    N3, C3, T3 = 16, 200, 1.0
    logits3 = jax.random.normal(k5, (N3, C3), dtype=jnp.float32)
    targets3 = jax.random.normal(k6, (N3, C3), dtype=jnp.float32)
    out3 = jax.block_until_ready(kldiv_pallas(logits3, targets3, T=T3))
    ref3 = _kldiv_ref(logits3, targets3, T=T3)
    assert jnp.allclose(out3, ref3, rtol=1e-5, atol=1e-5), (out3, ref3)

    print("KERNEL_OK")
</pallas_src>

<mosaic_0001>
module attributes {stable_mosaic.version = 11 : i64} {
  func.func @_kldiv_kernel(%arg0: i32, %arg1: i32, %arg2: memref<8x128xf32, #tpu.memory_space<vmem>>, %arg3: memref<8x128xf32, #tpu.memory_space<vmem>>, %arg4: memref<1x8x128xf32, #tpu.memory_space<vmem>>, %arg5: memref<8x1xf32, #tpu.memory_space<vmem>>, %arg6: memref<8x1xf32, #tpu.memory_space<vmem>>, %arg7: memref<8x1xf32, #tpu.memory_space<vmem>>, %arg8: memref<8x1xf32, #tpu.memory_space<vmem>>, %arg9: memref<8x1xf32, #tpu.memory_space<vmem>>) attributes {dimension_semantics = [#tpu.dimension_semantics<parallel>, #tpu.dimension_semantics<arbitrary>], iteration_bounds = array<i64: 3, 2>, scalar_prefetch = 0 : i64, scratch_operands = 5 : i64, tpu.core_type = #tpu.core_type<tc>, window_params = [{transform_indices = @transform_0, window_bounds = array<i64: 8, 128>}, {transform_indices = @transform_1, window_bounds = array<i64: 8, 128>}, {transform_indices = @transform_2, window_bounds = array<i64: 1, 8, 128>}]} {
    %c0_i32 = arith.constant 0 : i32
    %0 = arith.cmpi eq, %arg1, %c0_i32 : i32
    %1 = arith.extui %0 : i1 to i32
    %c0_i32_0 = arith.constant 0 : i32
    %2 = arith.cmpi ne, %1, %c0_i32_0 : i32
    scf.if %2 {
      %cst_41 = arith.constant 0xFF800000 : f32
      %72 = vector.broadcast %cst_41 : f32 to vector<8x1xf32>
      %c0_42 = arith.constant 0 : index
      %c0_43 = arith.constant 0 : index
      %73 = vector.load %arg5[%c0_42, %c0_43] : memref<8x1xf32, #tpu.memory_space<vmem>>, vector<8x1xf32>
      tpu.vector_store %arg5[%c0_42, %c0_43], %72 {strides = array<i32>} : memref<8x1xf32, #tpu.memory_space<vmem>>, vector<8x1xf32>,
      %cst_44 = arith.constant 0xFF800000 : f32
      %74 = vector.broadcast %cst_44 : f32 to vector<8x1xf32>
      %c0_45 = arith.constant 0 : index
      %c0_46 = arith.constant 0 : index
      %75 = vector.load %arg7[%c0_45, %c0_46] : memref<8x1xf32, #tpu.memory_space<vmem>>, vector<8x1xf32>
      tpu.vector_store %arg7[%c0_45, %c0_46], %74 {strides = array<i32>} : memref<8x1xf32, #tpu.memory_space<vmem>>, vector<8x1xf32>,
      %cst_47 = arith.constant 0.000000e+00 : f32
      %76 = vector.broadcast %cst_47 : f32 to vector<8x1xf32>
      %c0_48 = arith.constant 0 : index
      %c0_49 = arith.constant 0 : index
      %77 = vector.load %arg6[%c0_48, %c0_49] : memref<8x1xf32, #tpu.memory_space<vmem>>, vector<8x1xf32>
      tpu.vector_store %arg6[%c0_48, %c0_49], %76 {strides = array<i32>} : memref<8x1xf32, #tpu.memory_space<vmem>>, vector<8x1xf32>,
      %cst_50 = arith.constant 0.000000e+00 : f32
      %78 = vector.broadcast %cst_50 : f32 to vector<8x1xf32>
      %c0_51 = arith.constant 0 : index
      %c0_52 = arith.constant 0 : index
      %79 = vector.load %arg8[%c0_51, %c0_52] : memref<8x1xf32, #tpu.memory_space<vmem>>, vector<8x1xf32>
      tpu.vector_store %arg8[%c0_51, %c0_52], %78 {strides = array<i32>} : memref<8x1xf32, #tpu.memory_space<vmem>>, vector<8x1xf32>,
      %cst_53 = arith.constant 0.000000e+00 : f32
      %80 = vector.broadcast %cst_53 : f32 to vector<8x1xf32>
      %c0_54 = arith.constant 0 : index
      %c0_55 = arith.constant 0 : index
      %81 = vector.load %arg9[%c0_54, %c0_55] : memref<8x1xf32, #tpu.memory_space<vmem>>, vector<8x1xf32>
      tpu.vector_store %arg9[%c0_54, %c0_55], %80 {strides = array<i32>} : memref<8x1xf32, #tpu.memory_space<vmem>>, vector<8x1xf32>,
    } else {
    }
    %c0 = arith.constant 0 : index
    %c0_1 = arith.constant 0 : index
    %3 = vector.load %arg2[%c0, %c0_1] : memref<8x128xf32, #tpu.memory_space<vmem>>, vector<8x128xf32>
    %cst = arith.constant 2.500000e-01 : f32
    %4 = vector.broadcast %cst : f32 to vector<8x128xf32>
    %5 = arith.mulf %3, %4 : vector<8x128xf32>
    %c0_2 = arith.constant 0 : index
    %c0_3 = arith.constant 0 : index
    %6 = vector.load %arg3[%c0_2, %c0_3] : memref<8x128xf32, #tpu.memory_space<vmem>>, vector<8x128xf32>
    %cst_4 = arith.constant 2.500000e-01 : f32
    %7 = vector.broadcast %cst_4 : f32 to vector<8x128xf32>
    %8 = arith.mulf %6, %7 : vector<8x128xf32>
    %c0_5 = arith.constant 0 : index
    %c0_6 = arith.constant 0 : index
    %9 = vector.load %arg5[%c0_5, %c0_6] : memref<8x1xf32, #tpu.memory_space<vmem>>, vector<8x1xf32>
    %cst_7 = arith.constant dense<0xFF800000> : vector<8xf32>
    %10 = vector.multi_reduction <maximumf>, %5, %cst_7 [1] : vector<8x128xf32> to vector<8xf32>
    %11 = vector.shape_cast %10 : vector<8xf32> to vector<8x1xf32>
    %12 = arith.maximumf %9, %11 : vector<8x1xf32>
    %cst_8 = arith.constant 0xFF800000 : f32
    %13 = vector.broadcast %cst_8 : f32 to vector<8x1xf32>
    %14 = arith.cmpf oeq, %12, %13 : vector<8x1xf32>
    %cst_9 = arith.constant 0.000000e+00 : f32
    %15 = vector.broadcast %cst_9 : f32 to vector<8x1xf32>
    %16 = arith.select %14, %15, %12 : vector<8x1xi1>, vector<8x1xf32>
    %cst_10 = arith.constant 0xFF800000 : f32
    %17 = vector.broadcast %cst_10 : f32 to vector<8x1xf32>
    %18 = arith.cmpf oeq, %9, %17 : vector<8x1xf32>
    %19 = arith.subf %9, %12 : vector<8x1xf32>
    %20 = math.exp %19 : vector<8x1xf32>
    %cst_11 = arith.constant 0.000000e+00 : f32
    %21 = vector.broadcast %cst_11 : f32 to vector<8x1xf32>
    %22 = arith.select %18, %21, %20 : vector<8x1xi1>, vector<8x1xf32>
    %c0_12 = arith.constant 0 : index
    %c0_13 = arith.constant 0 : index
    %23 = vector.load %arg6[%c0_12, %c0_13] : memref<8x1xf32, #tpu.memory_space<vmem>>, vector<8x1xf32>
    %24 = arith.mulf %22, %23 : vector<8x1xf32>
    %25 = vector.broadcast %16 : vector<8x1xf32> to vector<8x128xf32>
    %26 = arith.subf %5, %25 : vector<8x128xf32>
    %27 = math.exp %26 : vector<8x128xf32>
    %cst_14 = arith.constant dense<0.000000e+00> : vector<8xf32>
    %28 = vector.multi_reduction <add>, %27, %cst_14 [1] : vector<8x128xf32> to vector<8xf32>
    %29 = vector.shape_cast %28 : vector<8xf32> to vector<8x1xf32>
    %30 = arith.addf %24, %29 : vector<8x1xf32>
    %c0_15 = arith.constant 0 : index
    %c0_16 = arith.constant 0 : index
    %31 = vector.load %arg6[%c0_15, %c0_16] : memref<8x1xf32, #tpu.memory_space<vmem>>, vector<8x1xf32>
    tpu.vector_store %arg6[%c0_15, %c0_16], %30 {strides = array<i32>} : memref<8x1xf32, #tpu.memory_space<vmem>>, vector<8x1xf32>,
    %c0_17 = arith.constant 0 : index
    %c0_18 = arith.constant 0 : index
    %32 = vector.load %arg5[%c0_17, %c0_18] : memref<8x1xf32, #tpu.memory_space<vmem>>, vector<8x1xf32>
    tpu.vector_store %arg5[%c0_17, %c0_18], %12 {strides = array<i32>} : memref<8x1xf32, #tpu.memory_space<vmem>>, vector<8x1xf32>,
    %c0_19 = arith.constant 0 : index
    %c0_20 = arith.constant 0 : index
    %33 = vector.load %arg7[%c0_19, %c0_20] : memref<8x1xf32, #tpu.memory_space<vmem>>, vector<8x1xf32>
    %cst_21 = arith.constant dense<0xFF800000> : vector<8xf32>
    %34 = vector.multi_reduction <maximumf>, %8, %cst_21 [1] : vector<8x128xf32> to vector<8xf32>
    %35 = vector.shape_cast %34 : vector<8xf32> to vector<8x1xf32>
    %36 = arith.maximumf %33, %35 : vector<8x1xf32>
    %cst_22 = arith.constant 0xFF800000 : f32
    %37 = vector.broadcast %cst_22 : f32 to vector<8x1xf32>
    %38 = arith.cmpf oeq, %36, %37 : vector<8x1xf32>
    %cst_23 = arith.constant 0.000000e+00 : f32
    %39 = vector.broadcast %cst_23 : f32 to vector<8x1xf32>
    %40 = arith.select %38, %39, %36 : vector<8x1xi1>, vector<8x1xf32>
    %cst_24 = arith.constant 0xFF800000 : f32
    %41 = vector.broadcast %cst_24 : f32 to vector<8x1xf32>
    %42 = arith.cmpf oeq, %33, %41 : vector<8x1xf32>
    %43 = arith.subf %33, %36 : vector<8x1xf32>
    %44 = math.exp %43 : vector<8x1xf32>
    %cst_25 = arith.constant 0.000000e+00 : f32
    %45 = vector.broadcast %cst_25 : f32 to vector<8x1xf32>
    %46 = arith.select %42, %45, %44 : vector<8x1xi1>, vector<8x1xf32>
    %47 = vector.broadcast %40 : vector<8x1xf32> to vector<8x128xf32>
    %48 = arith.subf %8, %47 : vector<8x128xf32>
    %49 = math.exp %48 : vector<8x128xf32>
    %c0_26 = arith.constant 0 : index
    %c0_27 = arith.constant 0 : index
    %50 = vector.load %arg8[%c0_26, %c0_27] : memref<8x1xf32, #tpu.memory_space<vmem>>, vector<8x1xf32>
    %51 = arith.mulf %46, %50 : vector<8x1xf32>
    %cst_28 = arith.constant dense<0.000000e+00> : vector<8xf32>
    %52 = vector.multi_reduction <add>, %49, %cst_28 [1] : vector<8x128xf32> to vector<8xf32>
    %53 = vector.shape_cast %52 : vector<8xf32> to vector<8x1xf32>
    %54 = arith.addf %51, %53 : vector<8x1xf32>
    %c0_29 = arith.constant 0 : index
    %c0_30 = arith.constant 0 : index
    %55 = vector.load %arg8[%c0_29, %c0_30] : memref<8x1xf32, #tpu.memory_space<vmem>>, vector<8x1xf32>
    tpu.vector_store %arg8[%c0_29, %c0_30], %54 {strides = array<i32>} : memref<8x1xf32, #tpu.memory_space<vmem>>, vector<8x1xf32>,
    %cst_31 = arith.constant 0.000000e+00 : f32
    %56 = vector.broadcast %cst_31 : f32 to vector<8x128xf32>
    %57 = arith.cmpf ogt, %49, %56 : vector<8x128xf32>
    %58 = arith.subf %8, %5 : vector<8x128xf32>
    %59 = arith.mulf %49, %58 : vector<8x128xf32>
    %cst_32 = arith.constant 0.000000e+00 : f32
    %60 = vector.broadcast %cst_32 : f32 to vector<8x128xf32>
    %61 = arith.select %57, %59, %60 : vector<8x128xi1>, vector<8x128xf32>
    %c0_33 = arith.constant 0 : index
    %c0_34 = arith.constant 0 : index
    %62 = vector.load %arg9[%c0_33, %c0_34] : memref<8x1xf32, #tpu.memory_space<vmem>>, vector<8x1xf32>
    %63 = arith.mulf %46, %62 : vector<8x1xf32>
    %cst_35 = arith.constant dense<0.000000e+00> : vector<8xf32>
    %64 = vector.multi_reduction <add>, %61, %cst_35 [1] : vector<8x128xf32> to vector<8xf32>
    %65 = vector.shape_cast %64 : vector<8xf32> to vector<8x1xf32>
    %66 = arith.addf %63, %65 : vector<8x1xf32>
    %c0_36 = arith.constant 0 : index
    %c0_37 = arith.constant 0 : index
    %67 = vector.load %arg9[%c0_36, %c0_37] : memref<8x1xf32, #tpu.memory_space<vmem>>, vector<8x1xf32>
    tpu.vector_store %arg9[%c0_36, %c0_37], %66 {strides = array<i32>} : memref<8x1xf32, #tpu.memory_space<vmem>>, vector<8x1xf32>,
    %c0_38 = arith.constant 0 : index
    %c0_39 = arith.constant 0 : index
    %68 = vector.load %arg7[%c0_38, %c0_39] : memref<8x1xf32, #tpu.memory_space<vmem>>, vector<8x1xf32>
    tpu.vector_store %arg7[%c0_38, %c0_39], %36 {strides = array<i32>} : memref<8x1xf32, #tpu.memory_space<vmem>>, vector<8x1xf32>,
    %c1_i32 = arith.constant 1 : i32
    %69 = arith.cmpi eq, %arg1, %c1_i32 : i32
    %70 = arith.extui %69 : i1 to i32
    %c0_i32_40 = arith.constant 0 : i32
    %71 = arith.cmpi ne, %70, %c0_i32_40 : i32
    scf.if %71 {
      %c0_41 = arith.constant 0 : index
      %c0_42 = arith.constant 0 : index
      %72 = vector.load %arg9[%c0_41, %c0_42] : memref<8x1xf32, #tpu.memory_space<vmem>>, vector<8x1xf32>
      %c0_43 = arith.constant 0 : index
      %c0_44 = arith.constant 0 : index
      %73 = vector.load %arg8[%c0_43, %c0_44] : memref<8x1xf32, #tpu.memory_space<vmem>>, vector<8x1xf32>
      %74 = tpu.reciprocal %73 : vector<8x1xf32> -> vector<8x1xf32>
      %75 = arith.mulf %72, %74 : vector<8x1xf32>
      %c0_45 = arith.constant 0 : index
      %c0_46 = arith.constant 0 : index
      %76 = vector.load %arg5[%c0_45, %c0_46] : memref<8x1xf32, #tpu.memory_space<vmem>>, vector<8x1xf32>
      %c0_47 = arith.constant 0 : index
      %c0_48 = arith.constant 0 : index
      %77 = vector.load %arg7[%c0_47, %c0_48] : memref<8x1xf32, #tpu.memory_space<vmem>>, vector<8x1xf32>
      %78 = arith.subf %76, %77 : vector<8x1xf32>
      %79 = arith.addf %75, %78 : vector<8x1xf32>
      %c0_49 = arith.constant 0 : index
      %c0_50 = arith.constant 0 : index
      %80 = vector.load %arg6[%c0_49, %c0_50] : memref<8x1xf32, #tpu.memory_space<vmem>>, vector<8x1xf32>
      %81 = math.log %80 : vector<8x1xf32>
      %82 = arith.addf %79, %81 : vector<8x1xf32>
      %c0_51 = arith.constant 0 : index
      %c0_52 = arith.constant 0 : index
      %83 = vector.load %arg8[%c0_51, %c0_52] : memref<8x1xf32, #tpu.memory_space<vmem>>, vector<8x1xf32>
      %84 = math.log %83 : vector<8x1xf32>
      %85 = arith.subf %82, %84 : vector<8x1xf32>
      %c8_i32 = arith.constant 8 : i32
      %86 = arith.muli %arg0, %c8_i32 : i32
      %87 = tpu.iota {dimensions = array<i32: 0>} : vector<8x1xi32>
      %88 = vector.broadcast %86 : i32 to vector<8x1xi32>
      %89 = arith.addi %88, %87 : vector<8x1xi32>
      %c20_i32 = arith.constant 20 : i32
      %90 = vector.broadcast %c20_i32 : i32 to vector<8x1xi32>
      %91 = arith.cmpi slt, %89, %90 : vector<8x1xi32>
      %cst_53 = arith.constant 0.000000e+00 : f32
      %92 = vector.broadcast %cst_53 : f32 to vector<8x1xf32>
      %93 = arith.select %91, %85, %92 : vector<8x1xi1>, vector<8x1xf32>
      %94 = vector.shape_cast %93 : vector<8x1xf32> to vector<1x8x1xf32>
      %cst_54 = arith.constant dense<0.000000e+00> : vector<1xf32>
      %95 = vector.multi_reduction <add>, %94, %cst_54 [1, 2] : vector<1x8x1xf32> to vector<1xf32>
      %96 = vector.shape_cast %95 : vector<1xf32> to vector<1x1x1xf32>
      %97 = vector.extract %96[0, 0, 0] : f32 from vector<1x1x1xf32>
      %98 = vector.broadcast %97 : f32 to vector<1x8x128xf32>
      %c0_55 = arith.constant 0 : index
      %c0_56 = arith.constant 0 : index
      %c0_57 = arith.constant 0 : index
      %99 = vector.load %arg4[%c0_55, %c0_56, %c0_57] : memref<1x8x128xf32, #tpu.memory_space<vmem>>, vector<1x8x128xf32>
      tpu.vector_store %arg4[%c0_55, %c0_56, %c0_57], %98 {strides = array<i32>} : memref<1x8x128xf32, #tpu.memory_space<vmem>>, vector<1x8x128xf32>,
    } else {
    }
    return
  }
  func.func @transform_0(%arg0: i32, %arg1: i32) -> (i32, i32) {
    %c0_i32 = arith.constant 0 : i32
    return %arg0, %arg1 : i32, i32
  }
  func.func @transform_1(%arg0: i32, %arg1: i32) -> (i32, i32) {
    %c0_i32 = arith.constant 0 : i32
    return %arg0, %arg1 : i32, i32
  }
  func.func @transform_2(%arg0: i32, %arg1: i32) -> (i32, i32, i32) {
    %c0_i32 = arith.constant 0 : i32
    %c0_i32_0 = arith.constant 0 : i32
    %c0_i32_1 = arith.constant 0 : i32
    return %arg0, %c0_i32, %c0_i32_0 : i32, i32, i32
  }
}

</mosaic_0001>

<llo_original>
// kernel: tpu_custom_call.1
$region0: #{tpu_custom_call.1}
  #allocation0 [shape = 'u32[]', space=smem, size = 0x4, offset = 0x4, fixed_abs, tag = 'smem constant byte address 0x4 - core index']
  #allocation1 [shape = 'u32[144,128]{1,0:T(1,128)}', space=vmem, size = 0x12000, scoped, tag = 'internal scratch']
  #allocation2 [shape = 'f32[8,1]{1,0:T(8,128)}', space=vmem, size = 0x1000, scoped, tag = 'scratch operand']
  #allocation3 [shape = 'f32[8,1]{1,0:T(8,128)}', space=vmem, size = 0x1000, scoped, tag = 'scratch operand']
  #allocation4 [shape = 'f32[8,1]{1,0:T(8,128)}', space=vmem, size = 0x1000, scoped, tag = 'scratch operand']
  #allocation5 [shape = 'f32[8,1]{1,0:T(8,128)}', space=vmem, size = 0x1000, scoped, tag = 'scratch operand']
  #allocation6 [shape = 'f32[8,1]{1,0:T(8,128)}', space=vmem, size = 0x1000, scoped, tag = 'scratch operand']
  %s0 = inlined_call_operand.hbm [shape: f32[20,256], index: 0, kind: input, shape index: {}]
  %s1 = inlined_call_operand.hbm [shape: f32[20,256], index: 1, kind: input, shape index: {}]
  %s2 = inlined_call_operand.hbm [shape: f32[3,8,128], index: 2, kind: output, shape index: {}]
  %s3 = sld [smem:[#allocation0]]
  $region57: #{tpu_custom_call.1} parent=0
    _
  %s5 = ssub.s32 1, %s3
  %s6 = scalar_select 0, %s5, %s3
  $region1: #{tpu_custom_call.1} parent=0
    #allocation7 [shape = 'u8[8192]{0}', space=vmem, size = 0x2000, scoped, tag = 'input window, operand 0']
    #allocation8 [shape = 's32[2]{0}', space=sflag, size = 0x8, scoped, tag = 'scoped memory for tpu_custom_call.1']
    #allocation9 [shape = 's32[2]{0}', space=sflag, size = 0x8, scoped, tag = 'scoped memory for tpu_custom_call.1']
    #allocation10 [shape = 'u8[8192]{0}', space=vmem, size = 0x2000, scoped, tag = 'input window, operand 1']
    #allocation11 [shape = 's32[2]{0}', space=sflag, size = 0x8, scoped, tag = 'scoped memory for tpu_custom_call.1']
    #allocation12 [shape = 'u8[8192]{0}', space=vmem, size = 0x2000, scoped, tag = 'output window, operand 0']
    %7 = vsyncpa [#allocation8], 0
    %s8 = scalar_lea.sflag [#allocation8], 1
    %9 = vsyncpa %s8, 0
    %10 = vsyncpa [#allocation11], 0
    %s11 = scalar_lea.sflag [#allocation11], 1
    %12 = vsyncpa %s11, 0
    %13 = vsyncpa [#allocation9], 0
    %s14 = scalar_lea.sflag [#allocation9], 1
    %15 = vsyncpa %s14, 0
    loop: start=0, step=1, limit=8
    $region2: #{tpu_custom_call.1} parent=1 // loop_pre_header
      _
    $region3: #{tpu_custom_call.1} parent=1 // loop_header
      %s17 = sphi 0, %s21
      %p18 = scmp.ge.s32.totalorder %s17, 8
      %s24 = sphi 0, %s36
      %s25 = sphi 0, %s32
      %s26 = sphi 0, %s24
      %s27 = sphi 0, %s25
      %s28 = sphi 0, %s26
      %s29 = sphi 0, %s27
      %s41 = sphi 0, %s43
      %s44 = sphi 0, %s41
      %s45 = sphi 0, %s44
      %s61 = sphi 0, %s45
      %s69 = sphi 0, %s71
      %s72 = sphi 0, %s69
      %s73 = sphi 0, %s72
      %s89 = sphi 0, %s73
      %s95 = sphi 0, %s97
      %s98 = sphi 0, %s95
      %s99 = sphi 0, %s98
      %s115 = sphi 0, %s99
    $region4: #{tpu_custom_call.1} parent=1 // loop_header_branch
      %20 = sbr.rel (%p18) target = $region8
    $region5: #{tpu_custom_call.1} parent=1 // loop_body
      %s22 = ssub.s32 %s17, 1
      %s23 = ssub.s32 %s17, 2
      %s30 = sadd.s32 1, %s25
      %p31 = scmp.ge.s32.totalorder %s30, 2
      %s32 = scalar_select %p31, 0, %s30
      %s33 = sadd.s32 1, %s24
      %s34 = scalar_select %p31, %s33, %s24
      %p35 = scmp.ge.s32.totalorder %s34, 3
      %s36 = scalar_select %p35, 0, %s34
      %s37 = ssub.s32 %s24, %s36
      %s38 = ssub.s32 %s25, %s32
      %s39 = sor.u32 %s37, %s38
      %p40 = scmp.eq.s32.totalorder %s39, 0
      %s42 = sadd.s32 %s41, 1
      %s43 = scalar_select %p40, %s41, %s42
      %p46 = pneg %p40
      %p47 = scmp.eq.s32.totalorder %s17, 5
      %p48 = por %p46, %p47
      %p49 = scmp.ne.s32.totalorder %s41, %s44
      %p50 = scmp.eq.s32.totalorder %s17, 0
      %p51 = por %p49, %p50
      %p52 = scmp.ne.s32.totalorder %s41, %s44
      %p53 = scmp.eq.s32.totalorder %s22, 5
      %p54 = por %p52, %p53
      %p55 = scmp.ne.s32.totalorder %s44, %s45
      %p56 = scmp.eq.s32.totalorder %s22, 0
      %p57 = por %p55, %p56
      %p58 = scmp.ne.s32.totalorder %s44, %s45
      %p59 = scmp.eq.s32.totalorder %s23, 5
      %p60 = por %p58, %p59
      %p62 = scmp.ne.s32.totalorder %s45, %s61
      %p63 = scmp.eq.s32.totalorder %s23, 0
      %p64 = por %p62, %p63
      %s65 = ssub.s32 %s24, %s36
      %s66 = ssub.s32 %s25, %s32
      %s67 = sor.u32 %s65, %s66
      %p68 = scmp.eq.s32.totalorder %s67, 0
      %s70 = sadd.s32 %s69, 1
      %s71 = scalar_select %p68, %s69, %s70
      %p74 = pneg %p68
      %p75 = scmp.eq.s32.totalorder %s17, 5
      %p76 = por %p74, %p75
      %p77 = scmp.ne.s32.totalorder %s69, %s72
      %p78 = scmp.eq.s32.totalorder %s17, 0
      %p79 = por %p77, %p78
      %p80 = scmp.ne.s32.totalorder %s69, %s72
      %p81 = scmp.eq.s32.totalorder %s22, 5
      %p82 = por %p80, %p81
      %p83 = scmp.ne.s32.totalorder %s72, %s73
      %p84 = scmp.eq.s32.totalorder %s22, 0
      %p85 = por %p83, %p84
      %p86 = scmp.ne.s32.totalorder %s72, %s73
      %p87 = scmp.eq.s32.totalorder %s23, 5
      %p88 = por %p86, %p87
      %p90 = scmp.ne.s32.totalorder %s73, %s89
      %p91 = scmp.eq.s32.totalorder %s23, 0
      %p92 = por %p90, %p91
      %s93 = ssub.s32 %s24, %s36
      %p94 = scmp.eq.s32.totalorder %s93, 0
      %s96 = sadd.s32 %s95, 1
      %s97 = scalar_select %p94, %s95, %s96
      %p100 = pneg %p94
      %p101 = scmp.eq.s32.totalorder %s17, 5
      %p102 = por %p100, %p101
      %p103 = scmp.ne.s32.totalorder %s95, %s98
      %p104 = scmp.eq.s32.totalorder %s17, 0
      %p105 = por %p103, %p104
      %p106 = scmp.ne.s32.totalorder %s95, %s98
      %p107 = scmp.eq.s32.totalorder %s22, 5
      %p108 = por %p106, %p107
      %p109 = scmp.ne.s32.totalorder %s98, %s99
      %p110 = scmp.eq.s32.totalorder %s22, 0
      %p111 = por %p109, %p110
      %p112 = scmp.ne.s32.totalorder %s98, %s99
      %p113 = scmp.eq.s32.totalorder %s23, 5
      %p114 = por %p112, %p113
      %p116 = scmp.ne.s32.totalorder %s99, %s115
      %p117 = scmp.eq.s32.totalorder %s23, 0
      %p118 = por %p116, %p117
      %p119 = scmp.le.s32.totalorder 1, %s17
      %p120 = scmp.lt.s32.totalorder %s17, 7
      %p121 = pnand %p119, %p120
      %p122 = pneg %p121
      // Predicated region
      $region9: #{tpu_custom_call.1} parent=5 // pred_check
        _
      $region10: #{tpu_custom_call.1} parent=5 // pred_check_branch
        %124 = sbr.rel (%p121) target = $region12
      $region11: #{tpu_custom_call.1} parent=5 // pred_region
        %s125 = ssub.s32 %s17, 1
      $region12: #{tpu_custom_call.1} parent=5 // pred_fallthru
        _
      %p126 = scmp.lt.s32.totalorder %s17, 6
      // Predicated region
      $region13: #{tpu_custom_call.1} parent=5 // pred_check
        %p127 = pneg %p126
      $region14: #{tpu_custom_call.1} parent=5 // pred_check_branch
        %129 = sbr.rel (%p127) target = $region16
      $region15: #{tpu_custom_call.1} parent=5 // pred_region
        // Predicated region
        $region17: #{tpu_custom_call.1} parent=15 // pred_check
          %p130 = pneg %p51
        $region18: #{tpu_custom_call.1} parent=15 // pred_check_branch
          %132 = sbr.rel (%p130) target = $region20
        $region19: #{tpu_custom_call.1} parent=15 // pred_region
          %s133 = sand.u32 %s41, 1
          %s134 = scalar_lea.sflag [#allocation8], %s133
          %s135 = sand.u32 %s41, 1
          %s136 = smul.addr %s135, 8
          %s137 = scalar_lea.vmem [#allocation7], %s136
          %s139 = ssub.s32 128, 128
          %140 = vsyncadd %s134, %s139
          %s141 = smul.addr %s24, 2
          %s142 = sadd.s32 %s25, %s141
          %s143 = smul.addr %s142, 128
          %s144 = scalar_lea.hbm %s0, %s143
          %s146 = sshll.u32 %s137, 4
          %s147 = int_to_ptr.vmem [resolvable:$true] %s146
          %149 = dma.hbm_to_vmem [thread:$0]  %s144, 128, %s147, %s134
        $region20: #{tpu_custom_call.1} parent=15 // pred_fallthru
          _
        // Predicated region
        $region21: #{tpu_custom_call.1} parent=15 // pred_check
          %p150 = pneg %p79
        $region22: #{tpu_custom_call.1} parent=15 // pred_check_branch
          %152 = sbr.rel (%p150) target = $region24
        $region23: #{tpu_custom_call.1} parent=15 // pred_region
          %s153 = sand.u32 %s69, 1
          %s154 = scalar_lea.sflag [#allocation11], %s153
          %s155 = sand.u32 %s69, 1
          %s156 = smul.addr %s155, 8
          %s157 = scalar_lea.vmem [#allocation10], %s156
          %s159 = ssub.s32 128, 128
          %160 = vsyncadd %s154, %s159
          %s161 = smul.addr %s24, 2
          %s162 = sadd.s32 %s25, %s161
          %s163 = smul.addr %s162, 128
          %s164 = scalar_lea.hbm %s1, %s163
          %s166 = sshll.u32 %s157, 4
          %s167 = int_to_ptr.vmem [resolvable:$true] %s166
          %169 = dma.hbm_to_vmem [thread:$0]  %s164, 128, %s167, %s154
        $region24: #{tpu_custom_call.1} parent=15 // pred_fallthru
          _
      $region16: #{tpu_custom_call.1} parent=5 // pred_fallthru
        _
      %p170 = scmp.le.s32.totalorder 1, %s17
      %p171 = scmp.lt.s32.totalorder %s17, 7
      %p172 = pnand %p170, %p171
      %p173 = pneg %p172
      // Predicated region
      $region25: #{tpu_custom_call.1} parent=5 // pred_check
        _
      $region26: #{tpu_custom_call.1} parent=5 // pred_check_branch
        %175 = sbr.rel (%p172) target = $region28
      $region27: #{tpu_custom_call.1} parent=5 // pred_region
        %s176 = ssub.s32 %s17, 1
        %s177 = sand.u32 %s44, 1
        %s178 = scalar_lea.sflag [#allocation8], %s177
        %s179 = sand.u32 %s44, 1
        %s180 = smul.addr %s179, 8
        %s181 = scalar_lea.vmem [#allocation7], %s180
        // Predicated region
        $region29: #{tpu_custom_call.1} parent=27 // pred_check
          %p182 = pneg %p57
        $region30: #{tpu_custom_call.1} parent=27 // pred_check_branch
          %184 = sbr.rel (%p182) target = $region32
        $region31: #{tpu_custom_call.1} parent=27 // pred_region
          %185 = dma.done %s178, 128
        $region32: #{tpu_custom_call.1} parent=27 // pred_fallthru
          _
        %s186 = sand.u32 %s72, 1
        %s187 = scalar_lea.sflag [#allocation11], %s186
        %s188 = sand.u32 %s72, 1
        %s189 = smul.addr %s188, 8
        %s190 = scalar_lea.vmem [#allocation10], %s189
        // Predicated region
        $region33: #{tpu_custom_call.1} parent=27 // pred_check
          %p191 = pneg %p85
        $region34: #{tpu_custom_call.1} parent=27 // pred_check_branch
          %193 = sbr.rel (%p191) target = $region36
        $region35: #{tpu_custom_call.1} parent=27 // pred_region
          %194 = dma.done %s187, 128
        $region36: #{tpu_custom_call.1} parent=27 // pred_fallthru
          _
        %s195 = sand.u32 %s44, 1
        %s196 = scalar_lea.sflag [#allocation8], %s195
        %s197 = sand.u32 %s44, 1
        %s198 = smul.addr %s197, 8
        %s199 = scalar_lea.vmem [#allocation7], %s198
        %p200 = pneg %p57
        %p201 = pneg %p54
        %s202 = sand.u32 %s72, 1
        %s203 = scalar_lea.sflag [#allocation11], %s202
        %s204 = sand.u32 %s72, 1
        %s205 = smul.addr %s204, 8
        %s206 = scalar_lea.vmem [#allocation10], %s205
        %p207 = pneg %p85
        %p208 = pneg %p82
        %p209 = pneg %p111
        %p210 = pneg %p108
        %s211 = sand.u32 %s98, 1
        %s212 = scalar_lea.sflag [#allocation9], %s211
        %s213 = sand.u32 %s98, 1
        %s214 = smul.addr %s213, 8
        %s215 = scalar_lea.vmem [#allocation12], %s214
        %p216 = scmp.eq.s32.totalorder %s27, 0
        // Predicated region
        $region37: #{tpu_custom_call.1} parent=27 // pred_check
          %p217 = pneg %p216
        $region38: #{tpu_custom_call.1} parent=27 // pred_check_branch
          %219 = sbr.rel (%p217) target = $region40
        $region39: #{tpu_custom_call.1} parent=27 // pred_region
          %vm220 = vcmask 7168
          %221 = vst.msk [vmem:[#allocation2] sm:$0xff] %vm220, -inf
          %222 = vst.msk [vmem:[#allocation4] sm:$0xff] %vm220, -inf
          %223 = vst.msk [vmem:[#allocation3] sm:$0xff] %vm220, 0.0
          %224 = vst.msk [vmem:[#allocation5] sm:$0xff] %vm220, 0.0
          %225 = vst.msk [vmem:[#allocation6] sm:$0xff] %vm220, 0.0
        $region40: #{tpu_custom_call.1} parent=27 // pred_fallthru
          _
        %v226 = vld [vmem:[%s181] sm:$0xff]
        %v227 = vmul.f32 %v226, 0.25
        %v228 = vld [vmem:[%s190] sm:$0xff]
        %v229 = vmul.f32 %v228, 0.25
        %v230 = vld [vmem:[#allocation2] sm:$0xff]
        %231 = vmax.xlane.f32.xlu0 %v227
        %v232 = vpop.xlane.xlu0 %231
        %v233 = vmax.f32 %v230, %v232
        %vm234 = vcmp.eq.f32.partialorder %v233, -inf
        %v235 = vsel %vm234, 0.0, %v233
        %vm236 = vcmp.eq.f32.partialorder %v230, -inf
        %v237 = vsub.f32 %v230, %v233
        %v238 = vmul.f32 %v237, 1.442695
        %v239 = vpow.pop %v238
        %v240 = vsel %vm236, 0.0, %v239
        %v241 = vld [vmem:[#allocation3] sm:$0xff]
        %v242 = vmul.f32 %v240, %v241
        %244 = vset.pattern.permute.xlu0 0
        %245 = vperm.xlu0 %244, %v235
        %v246 = vpop.permute.xlu0 %245
        %v248 = vsub.f32 %v227, %v246
        %v249 = vmul.f32 %v248, 1.442695
        %v250 = vpow.pop %v249
        %251 = vadd.xlane.f32.xlu0 %v250
        %v252 = vpop.xlane.xlu0 %251
        %v253 = vadd.f32 %v242, %v252
        %vm254 = vcmask 7168
        %255 = vst.msk [vmem:[#allocation3] sm:$0xff] %vm254, %v253
        %256 = vst.msk [vmem:[#allocation2] sm:$0xff] %vm254, %v233
        %v257 = vld [vmem:[#allocation4] sm:$0xff]
        %258 = vmax.xlane.f32.xlu0 %v229
        %v259 = vpop.xlane.xlu0 %258
        %v260 = vmax.f32 %v257, %v259
        %vm261 = vcmp.eq.f32.partialorder %v260, -inf
        %v262 = vsel %vm261, 0.0, %v260
        %vm263 = vcmp.eq.f32.partialorder %v257, -inf
        %v264 = vsub.f32 %v257, %v260
        %v265 = vmul.f32 %v264, 1.442695
        %v266 = vpow.pop %v265
        %v267 = vsel %vm263, 0.0, %v266
        %269 = vset.pattern.permute.xlu0 0
        %270 = vperm.xlu0 %269, %v262
        %v271 = vpop.permute.xlu0 %270
        %v273 = vsub.f32 %v229, %v271
        %v274 = vmul.f32 %v273, 1.442695
        %v275 = vpow.pop %v274
        %v276 = vld [vmem:[#allocation5] sm:$0xff]
        %v277 = vmul.f32 %v267, %v276
        %278 = vadd.xlane.f32.xlu0 %v275
        %v279 = vpop.xlane.xlu0 %278
        %v280 = vadd.f32 %v277, %v279
        %281 = vst.msk [vmem:[#allocation5] sm:$0xff] %vm254, %v280
        %vm282 = vcmp.gt.f32.partialorder %v275, 0.0
        %v283 = vsub.f32 %v229, %v227
        %v284 = vmul.f32 %v275, %v283
        %v285 = vsel %vm282, %v284, 0.0
        %v286 = vld [vmem:[#allocation6] sm:$0xff]
        %v287 = vmul.f32 %v267, %v286
        %288 = vadd.xlane.f32.xlu0 %v285
        %v289 = vpop.xlane.xlu0 %288
        %v290 = vadd.f32 %v287, %v289
        %291 = vst.msk [vmem:[#allocation6] sm:$0xff] %vm254, %v290
        %292 = vst.msk [vmem:[#allocation4] sm:$0xff] %vm254, %v260
        %p293 = scmp.eq.s32.totalorder %s27, 1
        // Predicated region
        $region41: #{tpu_custom_call.1} parent=27 // pred_check
          %p294 = pneg %p293
        $region42: #{tpu_custom_call.1} parent=27 // pred_check_branch
          %296 = sbr.rel (%p294) target = $region44
        $region43: #{tpu_custom_call.1} parent=27 // pred_region
          %v297 = vld [vmem:[#allocation6] sm:$0xff]
          %v298 = vld [vmem:[#allocation5] sm:$0xff]
          %v299 = vrcp.pop %v298
          %v300 = vmul.f32 %v297, %v299
          %v301 = vld [vmem:[#allocation2] sm:$0xff]
          %v302 = vld [vmem:[#allocation4] sm:$0xff]
          %v303 = vsub.f32 %v301, %v302
          %v304 = vadd.f32 %v300, %v303
          %v305 = vld [vmem:[#allocation3] sm:$0xff]
          %v306 = vlog2.pop %v305
          %v307 = vmul.f32 %v306, 0.6931472
          %v308 = vadd.f32 %v304, %v307
          %v309 = vlog2.pop %v298
          %v310 = vmul.f32 %v309, 0.6931472
          %v311 = vsub.f32 %v308, %v310
          %s312 = smul.u32 %s26, 8
          %v313 = vlaneseq
          %v314 = vshrl.u32 %v313, 7
          %v315 = vstv %s312
          %v316 = vadd.s32 %v315, %v314
          %vm317 = vcmp.lt.s32.totalorder %v316, 20
          %v318 = vsel %vm317, %v311, 0.0
          %v319 = vsel %vm254, %v318, 0.0
          %320 = vadd.xlane.f32.xlu0 %v319
          %v321 = vpop.xlane.xlu0 %320
          %v322 = vrot.slane %v321, 4
          %v323 = vadd.f32 %v321, %v322
          %v324 = vrot.slane %v323, 2
          %v325 = vadd.f32 %v323, %v324
          %v326 = vrot.slane %v325, 1
          %v327 = vadd.f32 %v325, %v326
          %s328 = vtos %v327
          %v329 = vstv %s328
          %330 = vst [vmem:[%s215] sm:$0xff] %v329
        $region44: #{tpu_custom_call.1} parent=27 // pred_fallthru
          _
        %s331 = sand.u32 %s98, 1
        %s332 = scalar_lea.sflag [#allocation9], %s331
        %s333 = sand.u32 %s98, 1
        %s334 = smul.addr %s333, 8
        %s335 = scalar_lea.vmem [#allocation12], %s334
        // Predicated region
        $region45: #{tpu_custom_call.1} parent=27 // pred_check
          %p336 = pneg %p108
        $region46: #{tpu_custom_call.1} parent=27 // pred_check_branch
          %338 = sbr.rel (%p336) target = $region48
        $region47: #{tpu_custom_call.1} parent=27 // pred_region
          %s340 = ssub.s32 128, 128
          %341 = vsyncadd %s332, %s340
          %s342 = smul.addr %s26, 128
          %s343 = scalar_lea.hbm %s2, %s342
          %s345 = sshll.u32 %s335, 4
          %s346 = int_to_ptr.vmem [resolvable:$true] %s345
          %348 = dma.vmem_to_hbm [thread:$0]  %s346, 128, %s343, %s332
        $region48: #{tpu_custom_call.1} parent=27 // pred_fallthru
          _
      $region28: #{tpu_custom_call.1} parent=5 // pred_fallthru
        _
      %p349 = scmp.le.s32.totalorder 2, %s17
      // Predicated region
      $region49: #{tpu_custom_call.1} parent=5 // pred_check
        %p350 = pneg %p349
      $region50: #{tpu_custom_call.1} parent=5 // pred_check_branch
        %352 = sbr.rel (%p350) target = $region52
      $region51: #{tpu_custom_call.1} parent=5 // pred_region
        %s353 = ssub.s32 %s17, 2
        // Predicated region
        $region53: #{tpu_custom_call.1} parent=51 // pred_check
          %p354 = pneg %p114
        $region54: #{tpu_custom_call.1} parent=51 // pred_check_branch
          %356 = sbr.rel (%p354) target = $region56
        $region55: #{tpu_custom_call.1} parent=51 // pred_region
          %s357 = sand.u32 %s99, 1
          %s358 = scalar_lea.sflag [#allocation9], %s357
          %s359 = sand.u32 %s99, 1
          %s360 = smul.addr %s359, 8
          %s361 = scalar_lea.vmem [#allocation12], %s360
          %362 = dma.done %s358, 128
        $region56: #{tpu_custom_call.1} parent=51 // pred_fallthru
          _
      $region52: #{tpu_custom_call.1} parent=5 // pred_fallthru
        _
    $region6: #{tpu_custom_call.1} parent=1 // loop_footer
      %s21 = sadd.s32 1, %s17
    $region7: #{tpu_custom_call.1} parent=1 // loop_footer_branch
      %16 = sbr.rel target = $region3
    $region8: #{tpu_custom_call.1} parent=1 // loop_exit
      _
    %363 = vsyncpa [#allocation8], 1
    %s364 = scalar_lea.sflag [#allocation8], 1
    %365 = vsyncpa %s364, 1
    %366 = vsyncpa [#allocation11], 1
    %s367 = scalar_lea.sflag [#allocation11], 1
    %368 = vsyncpa %s367, 1
    %369 = vsyncpa [#allocation9], 1
    %s370 = scalar_lea.sflag [#allocation9], 1
    %371 = vsyncpa %s370, 1

</llo_original>
